<compile_context>
chip_gen: v7x
topology: tpu7x:2x2x1
jax: 0.10.0
libtpu: 0.0.40
codegen_flags: <defaults>
</compile_context>

<pallas_src>
import jax
import jax.numpy as jnp
from jax.experimental import pallas as pl
from jax.experimental.pallas import tpu as pltpu


# ---------------------------------------------------------------------------
# Kernel 1: per-edge-type input projection  y[e] = x @ W[e]    (small matmul)
# ---------------------------------------------------------------------------
def _xw_kernel(x_ref, w_ref, y_ref):
    # x_ref: [tmp, Dip]   w_ref: [1, Dip, Dop]   y_ref: [1, tmp, Dop]
    y_ref[0] = jnp.dot(
        x_ref[...], w_ref[0], preferred_element_type=jnp.float32
    ).astype(y_ref.dtype)


# ---------------------------------------------------------------------------
# Kernel 2: out = relu(A @ Y + bias)   — the dominant E*N^2 adjacency stream
# ---------------------------------------------------------------------------
def _adj_matmul_bias_relu_kernel(a_ref, y_ref, bias_ref, o_ref, acc_ref):
    # a_ref: [tm, tk]  y_ref: [tk, tn]  bias_ref: [1, tn]  o_ref: [tm, tn]
    @pl.when(pl.program_id(2) == 0)
    def _():
        acc_ref[...] = jnp.zeros_like(acc_ref)

    acc_ref[...] += jnp.dot(
        a_ref[...], y_ref[...], preferred_element_type=jnp.float32
    )

    @pl.when(pl.program_id(2) == pl.num_programs(2) - 1)
    def _():
        o_ref[...] = jnp.maximum(
            acc_ref[...] + bias_ref[...], 0.0
        ).astype(o_ref.dtype)


# ---------------------------------------------------------------------------
# Wrapper
# ---------------------------------------------------------------------------
def _round_up(v, m):
    return ((v + m - 1) // m) * m


def _pick_tile(dim, candidates=(512, 256, 128)):
    for c in candidates:
        if dim % c == 0:
            return c
    return 128


def _vmem_budget_and_cap():
    """Generation-aware per-step VMEM budget (bytes) and physical capacity."""
    cap = 64 << 20  # conservative default: v7x per-core physical VMEM
    try:
        info = pltpu.get_tpu_info()
        cap = int(getattr(info, "vmem_capacity_bytes", cap))
    except Exception:
        pass
    # ~45% of physical VMEM for pipelined working set; cap for sanity.
    return min(int(cap * 0.45), 80 << 20), cap


def graph_conv_relu(x, edges, weight, bias, *, compute_dtype=jnp.bfloat16):
    """
    x:      [1, N, D_in]   (single graph batch, as in the simple GraphConv branch)
    edges:  [E, N, N]      adjacency per edge type
    weight: [E, D_in, D_out]
    bias:   [D_out]
    returns [1, N, D_out]
    """
    assert x.shape[0] == 1, "simple GraphConv branch requires a single graph batch"
    E, N, _ = edges.shape
    D_in = x.shape[2]
    D_out = weight.shape[2]
    assert weight.shape == (E, D_in, D_out)
    assert edges.shape == (E, N, N)
    out_dtype = x.dtype

    # Lane-dense padding (zero padding is exact: padded contraction rows/cols
    # contribute 0 and padded output rows/cols are sliced off at the end).
    Np = _round_up(N, 128)
    Dip = _round_up(D_in, 128)
    Dop = _round_up(D_out, 128)

    x2 = jnp.pad(x[0], ((0, Np - N), (0, Dip - D_in))).astype(jnp.float32)          # [Np, Dip]
    w2 = jnp.pad(weight, ((0, 0), (0, Dip - D_in), (0, Dop - D_out))).astype(jnp.float32)  # [E, Dip, Dop]
    b2 = jnp.pad(bias, (0, Dop - D_out)).reshape(1, Dop).astype(jnp.float32)         # [1, Dop]

    # Contraction-dim-last adjacency layout: A[n, e*Np + m] = edges[e, m, n].
    # One wrapper-side transpose buys contiguous streaming DMA for the single
    # largest HBM stream; bf16 halves its bytes (f32 accumulation in-kernel).
    edges_p = jnp.pad(edges, ((0, 0), (0, Np - N), (0, Np - N)))                     # [E, Np, Np]
    a = jnp.transpose(edges_p, (2, 0, 1)).reshape(Np, E * Np).astype(compute_dtype)  # [Np, E*Np]

    budget, vmem_cap = _vmem_budget_and_cap()
    csize = jnp.dtype(compute_dtype).itemsize

    # ---- Kernel 1: y[e] = x @ W[e]  ->  [E, Np, Dop] in compute_dtype --------
    tmp = _pick_tile(Np)
    need1 = 2 * (tmp * Dip * 4 + Dip * Dop * 4 + tmp * Dop * csize)  # double-buffered in/out
    vmem_limit1 = int(min(max(need1 + (8 << 20), 32 << 20), int(vmem_cap * 0.9)))
    y = pl.pallas_call(
        _xw_kernel,
        out_shape=jax.ShapeDtypeStruct((E, Np, Dop), compute_dtype),
        grid_spec=pltpu.PrefetchScalarGridSpec(
            num_scalar_prefetch=0,
            grid=(E, Np // tmp),
            in_specs=[
                pl.BlockSpec((tmp, Dip), lambda e, i: (i, 0)),
                pl.BlockSpec((1, Dip, Dop), lambda e, i: (e, 0, 0)),
            ],
            out_specs=pl.BlockSpec((1, tmp, Dop), lambda e, i: (e, i, 0)),
        ),
        compiler_params=pltpu.CompilerParams(
            dimension_semantics=("parallel", "parallel"),
            vmem_limit_bytes=vmem_limit1,
        ),
    )(x2, w2)
    y_flat = y.reshape(E * Np, Dop)  # [E*Np, Dop] — joint (e, m) contraction axis

    # ---- Kernel 2: out = relu(A @ Y + bias) ----------------------------------
    K = E * Np
    tn = _pick_tile(Dop)
    tm = _pick_tile(Np)

    def need_bytes(tm_, tk_, tn_):
        # Honest accounting: every input/output tile is double-buffered by
        # default; the f32 accumulator scratch is single-buffered.
        return (2 * tm_ * tk_ * csize      # A tile
                + 2 * tk_ * tn_ * csize    # Y tile
                + 2 * tn_ * 4              # bias tile
                + 2 * tm_ * tn_ * 4        # output tile
                + tm_ * tn_ * 4)           # accumulator scratch

    tk = 128
    for cand in range(min(K, 4096), 0, -128):   # multiples of 128, largest first
        if K % cand == 0 and need_bytes(tm, cand, tn) <= budget:
            tk = cand
            break
    while need_bytes(tm, tk, tn) > budget and tm > 128:
        tm //= 2  # stays a 128-multiple divisor of Np

    need2 = need_bytes(tm, tk, tn)
    vmem_limit2 = int(min(max(need2 + (8 << 20), 32 << 20), int(vmem_cap * 0.9)))

    out_p = pl.pallas_call(
        _adj_matmul_bias_relu_kernel,
        out_shape=jax.ShapeDtypeStruct((Np, Dop), out_dtype),
        grid_spec=pltpu.PrefetchScalarGridSpec(
            num_scalar_prefetch=0,
            grid=(Np // tm, Dop // tn, K // tk),
            in_specs=[
                pl.BlockSpec((tm, tk), lambda i, j, k: (i, k)),   # adjacency (contiguous last dim)
                pl.BlockSpec((tk, tn), lambda i, j, k: (k, j)),   # projected features
                pl.BlockSpec((1, tn), lambda i, j, k: (0, j)),    # bias
            ],
            out_specs=pl.BlockSpec((tm, tn), lambda i, j, k: (i, j)),
            scratch_shapes=[pltpu.VMEM((tm, tn), jnp.float32)],
        ),
        compiler_params=pltpu.CompilerParams(
            dimension_semantics=("parallel", "parallel", "arbitrary"),
            vmem_limit_bytes=vmem_limit2,
        ),
    )(a, y_flat, b2)

    # TODO(synk): nn.Dropout(p=0.2) treated as identity (inference mode).
    return out_p[:N, :D_out][None]  # [1, N, D_out]


def init_params(key, input_size, output_size, num_edge_type, dtype=jnp.float32):
    """Matches GraphConv.init_parameters:
    stdv = 1 / sqrt(num_edge_type * output_size); uniform(-stdv, stdv)."""
    stdv = 1.0 / (num_edge_type * output_size) ** 0.5
    kw, kb = jax.random.split(key)
    weight = jax.random.uniform(
        kw, (num_edge_type, input_size, output_size), dtype, -stdv, stdv)
    bias = jax.random.uniform(kb, (output_size,), dtype, -stdv, stdv)
    return weight, bias


if __name__ == "__main__":
    # Small shapes consistent with the module's forward.
    E = 3          # num_edge_type
    N = 16         # number of nodes
    D_in = 32      # input_size
    D_out = 32     # output_size

    key = jax.random.PRNGKey(0)
    k_x, k_e, k_p = jax.random.split(key, 3)

    x = jax.random.normal(k_x, (1, N, D_in), jnp.float32)
    edges = jax.random.uniform(k_e, (E, N, N), jnp.float32)
    weight, bias = init_params(k_p, D_in, D_out, E)

    # Pure-JAX reference (original association order, f32).
    act_ref = jnp.einsum("emn,md->end", edges, x[0])                 # edges^T @ x
    ref = jnp.maximum(jnp.einsum("end,edo->no", act_ref, weight) + bias, 0.0)[None]

    # f32 compute path: structural / numerical exactness check.
    out_f32 = jax.block_until_ready(
        graph_conv_relu(x, edges, weight, bias, compute_dtype=jnp.float32))
    assert out_f32.shape == (1, N, D_out)
    assert jnp.allclose(out_f32, ref, rtol=1e-4, atol=1e-4)

    # Default (performance) path: bf16 adjacency + bf16 projected features,
    # f32 accumulation -> bf16-level tolerance vs. the f32 reference.
    out = jax.block_until_ready(graph_conv_relu(x, edges, weight, bias))
    assert out.shape == (1, N, D_out)
    assert jnp.allclose(out, ref, rtol=5e-2, atol=5e-2)

    print("KERNEL_OK")
</pallas_src>

<mosaic_0001>
module attributes {stable_mosaic.version = 11 : i64} {
  func.func @_xw_kernel(%arg0: i32, %arg1: i32, %arg2: memref<128x128xf32, #tpu.memory_space<vmem>>, %arg3: memref<1x128x128xf32, #tpu.memory_space<vmem>>, %arg4: memref<1x128x128xf32, #tpu.memory_space<vmem>>) attributes {dimension_semantics = [#tpu.dimension_semantics<parallel>, #tpu.dimension_semantics<parallel>], iteration_bounds = array<i64: 3, 1>, scalar_prefetch = 0 : i64, scratch_operands = 0 : i64, tpu.core_type = #tpu.core_type<tc>, window_params = [{transform_indices = @transform_0, window_bounds = array<i64: 128, 128>}, {transform_indices = @transform_1, window_bounds = array<i64: 1, 128, 128>}, {transform_indices = @transform_2, window_bounds = array<i64: 1, 128, 128>}]} {
    %c0 = arith.constant 0 : index
    %c0_0 = arith.constant 0 : index
    %0 = vector.load %arg2[%c0, %c0_0] : memref<128x128xf32, #tpu.memory_space<vmem>>, vector<128x128xf32>
    %c0_1 = arith.constant 0 : index
    %c0_2 = arith.constant 0 : index
    %c0_3 = arith.constant 0 : index
    %1 = vector.load %arg3[%c0_1, %c0_2, %c0_3] : memref<1x128x128xf32, #tpu.memory_space<vmem>>, vector<1x128x128xf32>
    %2 = vector.shape_cast %1 : vector<1x128x128xf32> to vector<128x128xf32>
    %cst = arith.constant dense<0.000000e+00> : vector<128x128xf32>
    %3 = tpu.matmul %0, %2, %cst {dimension_numbers = #tpu.dot_dimension_numbers<[1], [0], [0], [1], [0, 0, 1, 1], [], []>} : vector<128x128xf32>, vector<128x128xf32>, vector<128x128xf32> -> vector<128x128xf32>
    %c0_4 = arith.constant 0 : index
    %c0_5 = arith.constant 0 : index
    %c0_6 = arith.constant 0 : index
    %4 = vector.load %arg4[%c0_4, %c0_5, %c0_6] : memref<1x128x128xf32, #tpu.memory_space<vmem>>, vector<1x128x128xf32>
    %5 = vector.shape_cast %4 : vector<1x128x128xf32> to vector<128x128xf32>
    %6 = vector.shape_cast %3 : vector<128x128xf32> to vector<1x128x128xf32>
    tpu.vector_store %arg4[%c0_4, %c0_5, %c0_6], %6 {strides = array<i32>} : memref<1x128x128xf32, #tpu.memory_space<vmem>>, vector<1x128x128xf32>,
    return
  }
  func.func @transform_0(%arg0: i32, %arg1: i32) -> (i32, i32) {
    %c0_i32 = arith.constant 0 : i32
    %c0_i32_0 = arith.constant 0 : i32
    return %arg1, %c0_i32 : i32, i32
  }
  func.func @transform_1(%arg0: i32, %arg1: i32) -> (i32, i32, i32) {
    %c0_i32 = arith.constant 0 : i32
    %c0_i32_0 = arith.constant 0 : i32
    %c0_i32_1 = arith.constant 0 : i32
    return %arg0, %c0_i32, %c0_i32_0 : i32, i32, i32
  }
  func.func @transform_2(%arg0: i32, %arg1: i32) -> (i32, i32, i32) {
    %c0_i32 = arith.constant 0 : i32
    %c0_i32_0 = arith.constant 0 : i32
    return %arg0, %arg1, %c0_i32 : i32, i32, i32
  }
}

</mosaic_0001>

<llo_original>
// kernel: tpu_custom_call.1
$region0: #{tpu_custom_call.1}
  #allocation0 [shape = 'u32[]', space=smem, size = 0x4, offset = 0x4, fixed_abs, tag = 'smem constant byte address 0x4 - core index']
  #allocation1 [shape = 'u32[144,128]{1,0:T(1,128)}', space=vmem, size = 0x12000, scoped, tag = 'internal scratch']
  %s0 = inlined_call_operand.hbm [shape: f32[128,128], index: 0, kind: input, shape index: {}]
  %s1 = inlined_call_operand.hbm [shape: f32[3,128,128], index: 1, kind: input, shape index: {}]
  %s2 = inlined_call_operand.hbm [shape: f32[3,128,128], index: 2, kind: output, shape index: {}]
  %s3 = sld [smem:[#allocation0]]
  $region49: #{tpu_custom_call.1} parent=0
    _
  %s5 = ssub.s32 1, %s3
  %s6 = scalar_select 0, %s5, %s3
  $region1: #{tpu_custom_call.1} parent=0
    #allocation2 [shape = 'u8[65536]{0}', space=vmem, size = 0x10000, scoped, tag = 'input window, operand 0, single buffered']
    #allocation3 [shape = 's32[2]{0}', space=sflag, size = 0x8, scoped, tag = 'scoped memory for tpu_custom_call.1']
    #allocation4 [shape = 's32[2]{0}', space=sflag, size = 0x8, scoped, tag = 'scoped memory for tpu_custom_call.1']
    #allocation5 [shape = 'u8[131072]{0}', space=vmem, size = 0x20000, scoped, tag = 'input window, operand 1']
    #allocation6 [shape = 's32[2]{0}', space=sflag, size = 0x8, scoped, tag = 'scoped memory for tpu_custom_call.1']
    #allocation7 [shape = 'u8[131072]{0}', space=vmem, size = 0x20000, scoped, tag = 'output window, operand 0']
    %7 = vsyncpa [#allocation3], 0
    %8 = vsyncpa [#allocation6], 0
    %s9 = scalar_lea.sflag [#allocation6], 1
    %10 = vsyncpa %s9, 0
    %11 = vsyncpa [#allocation4], 0
    %s12 = scalar_lea.sflag [#allocation4], 1
    %13 = vsyncpa %s12, 0
    loop: start=0, step=1, limit=5
    $region2: #{tpu_custom_call.1} parent=1 // loop_pre_header
      _
    $region3: #{tpu_custom_call.1} parent=1 // loop_header
      %s15 = sphi 0, %s19
      %p16 = scmp.ge.s32.totalorder %s15, 5
      %s22 = sphi 0, %s34
      %s23 = sphi 0, %s30
      %s24 = sphi 0, %s22
      %s25 = sphi 0, %s23
      %s26 = sphi 0, %s24
      %s27 = sphi 0, %s25
      %s37 = sphi 0, %s39
      %s40 = sphi 0, %s37
      %s41 = sphi 0, %s40
      %s57 = sphi 0, %s41
      %s63 = sphi 0, %s65
      %s66 = sphi 0, %s63
      %s67 = sphi 0, %s66
      %s83 = sphi 0, %s67
      %s91 = sphi 0, %s93
      %s94 = sphi 0, %s91
      %s95 = sphi 0, %s94
      %s111 = sphi 0, %s95
    $region4: #{tpu_custom_call.1} parent=1 // loop_header_branch
      %18 = sbr.rel (%p16) target = $region8
    $region5: #{tpu_custom_call.1} parent=1 // loop_body
      %s20 = ssub.s32 %s15, 1
      %s21 = ssub.s32 %s15, 2
      %s28 = sadd.s32 1, %s23
      %p29 = scmp.ge.s32.totalorder %s28, 1
      %s30 = scalar_select %p29, 0, %s28
      %s31 = sadd.s32 1, %s22
      %s32 = scalar_select %p29, %s31, %s22
      %p33 = scmp.ge.s32.totalorder %s32, 3
      %s34 = scalar_select %p33, 0, %s32
      %s35 = ssub.s32 %s23, %s30
      %p36 = scmp.eq.s32.totalorder %s35, 0
      %s38 = sadd.s32 %s37, 1
      %s39 = scalar_select %p36, %s37, %s38
      %p42 = pneg %p36
      %p43 = scmp.eq.s32.totalorder %s15, 2
      %p44 = por %p42, %p43
      %p45 = scmp.ne.s32.totalorder %s37, %s40
      %p46 = scmp.eq.s32.totalorder %s15, 0
      %p47 = por %p45, %p46
      %p48 = scmp.ne.s32.totalorder %s37, %s40
      %p49 = scmp.eq.s32.totalorder %s20, 2
      %p50 = por %p48, %p49
      %p51 = scmp.ne.s32.totalorder %s40, %s41
      %p52 = scmp.eq.s32.totalorder %s20, 0
      %p53 = por %p51, %p52
      %p54 = scmp.ne.s32.totalorder %s40, %s41
      %p55 = scmp.eq.s32.totalorder %s21, 2
      %p56 = por %p54, %p55
      %p58 = scmp.ne.s32.totalorder %s41, %s57
      %p59 = scmp.eq.s32.totalorder %s21, 0
      %p60 = por %p58, %p59
      %s61 = ssub.s32 %s22, %s34
      %p62 = scmp.eq.s32.totalorder %s61, 0
      %s64 = sadd.s32 %s63, 1
      %s65 = scalar_select %p62, %s63, %s64
      %p68 = pneg %p62
      %p69 = scmp.eq.s32.totalorder %s15, 2
      %p70 = por %p68, %p69
      %p71 = scmp.ne.s32.totalorder %s63, %s66
      %p72 = scmp.eq.s32.totalorder %s15, 0
      %p73 = por %p71, %p72
      %p74 = scmp.ne.s32.totalorder %s63, %s66
      %p75 = scmp.eq.s32.totalorder %s20, 2
      %p76 = por %p74, %p75
      %p77 = scmp.ne.s32.totalorder %s66, %s67
      %p78 = scmp.eq.s32.totalorder %s20, 0
      %p79 = por %p77, %p78
      %p80 = scmp.ne.s32.totalorder %s66, %s67
      %p81 = scmp.eq.s32.totalorder %s21, 2
      %p82 = por %p80, %p81
      %p84 = scmp.ne.s32.totalorder %s67, %s83
      %p85 = scmp.eq.s32.totalorder %s21, 0
      %p86 = por %p84, %p85
      %s87 = ssub.s32 %s22, %s34
      %s88 = ssub.s32 %s23, %s30
      %s89 = sor.u32 %s87, %s88
      %p90 = scmp.eq.s32.totalorder %s89, 0
      %s92 = sadd.s32 %s91, 1
      %s93 = scalar_select %p90, %s91, %s92
      %p96 = pneg %p90
      %p97 = scmp.eq.s32.totalorder %s15, 2
      %p98 = por %p96, %p97
      %p99 = scmp.ne.s32.totalorder %s91, %s94
      %p100 = scmp.eq.s32.totalorder %s15, 0
      %p101 = por %p99, %p100
      %p102 = scmp.ne.s32.totalorder %s91, %s94
      %p103 = scmp.eq.s32.totalorder %s20, 2
      %p104 = por %p102, %p103
      %p105 = scmp.ne.s32.totalorder %s94, %s95
      %p106 = scmp.eq.s32.totalorder %s20, 0
      %p107 = por %p105, %p106
      %p108 = scmp.ne.s32.totalorder %s94, %s95
      %p109 = scmp.eq.s32.totalorder %s21, 2
      %p110 = por %p108, %p109
      %p112 = scmp.ne.s32.totalorder %s95, %s111
      %p113 = scmp.eq.s32.totalorder %s21, 0
      %p114 = por %p112, %p113
      %p115 = scmp.le.s32.totalorder 1, %s15
      %p116 = scmp.lt.s32.totalorder %s15, 4
      %p117 = pnand %p115, %p116
      %p118 = pneg %p117
      // Predicated region
      $region9: #{tpu_custom_call.1} parent=5 // pred_check
        _
      $region10: #{tpu_custom_call.1} parent=5 // pred_check_branch
        %120 = sbr.rel (%p117) target = $region12
      $region11: #{tpu_custom_call.1} parent=5 // pred_region
        %s121 = ssub.s32 %s15, 1
        // Predicated region
        $region13: #{tpu_custom_call.1} parent=11 // pred_check
          %p122 = pneg %p53
        $region14: #{tpu_custom_call.1} parent=11 // pred_check_branch
          %124 = sbr.rel (%p122) target = $region16
        $region15: #{tpu_custom_call.1} parent=11 // pred_region
          %s125 = smul.u32 16, %s25
          %s127 = ssub.s32 2048, 2048
          %128 = vsyncadd [#allocation3], %s127
          %s129 = smul.addr %s125, 128
          %s130 = scalar_lea.hbm %s0, %s129
          %s131 = sshll.u32 [#allocation2], 4
          %s132 = int_to_ptr.vmem [resolvable:$true] %s131
          %137 = dma.hbm_to_vmem [thread:$0]  %s130, 2048, %s132, [#allocation3], 128, 128, 8
        $region16: #{tpu_custom_call.1} parent=11 // pred_fallthru
          _
      $region12: #{tpu_custom_call.1} parent=5 // pred_fallthru
        _
      %p138 = scmp.lt.s32.totalorder %s15, 3
      // Predicated region
      $region17: #{tpu_custom_call.1} parent=5 // pred_check
        %p139 = pneg %p138
      $region18: #{tpu_custom_call.1} parent=5 // pred_check_branch
        %141 = sbr.rel (%p139) target = $region20
      $region19: #{tpu_custom_call.1} parent=5 // pred_region
        // Predicated region
        $region21: #{tpu_custom_call.1} parent=19 // pred_check
          %p142 = pneg %p73
        $region22: #{tpu_custom_call.1} parent=19 // pred_check_branch
          %144 = sbr.rel (%p142) target = $region24
        $region23: #{tpu_custom_call.1} parent=19 // pred_region
          %s145 = sand.u32 %s63, 1
          %s146 = scalar_lea.sflag [#allocation6], %s145
          %s147 = sand.u32 %s63, 1
          %s148 = smul.addr %s147, 128
          %s149 = scalar_lea.vmem [#allocation5], %s148
          %s151 = ssub.s32 2048, 2048
          %152 = vsyncadd %s146, %s151
          %s153 = smul.addr %s22, 16
          %s154 = smul.addr %s153, 128
          %s155 = scalar_lea.hbm %s1, %s154
          %s156 = sshll.u32 %s149, 4
          %s157 = int_to_ptr.vmem [resolvable:$true] %s156
          %162 = dma.hbm_to_vmem [thread:$0]  %s155, 2048, %s157, %s146, 128, 128, 8
        $region24: #{tpu_custom_call.1} parent=19 // pred_fallthru
          _
      $region20: #{tpu_custom_call.1} parent=5 // pred_fallthru
        _
      %p163 = scmp.le.s32.totalorder 1, %s15
      %p164 = scmp.lt.s32.totalorder %s15, 4
      %p165 = pnand %p163, %p164
      %p166 = pneg %p165
      // Predicated region
      $region25: #{tpu_custom_call.1} parent=5 // pred_check
        _
      $region26: #{tpu_custom_call.1} parent=5 // pred_check_branch
        %168 = sbr.rel (%p165) target = $region28
      $region27: #{tpu_custom_call.1} parent=5 // pred_region
        %s169 = ssub.s32 %s15, 1
        // Predicated region
        $region29: #{tpu_custom_call.1} parent=27 // pred_check
          %p170 = pneg %p53
        $region30: #{tpu_custom_call.1} parent=27 // pred_check_branch
          %172 = sbr.rel (%p170) target = $region32
        $region31: #{tpu_custom_call.1} parent=27 // pred_region
          %173 = dma.done [#allocation3], 2048
        $region32: #{tpu_custom_call.1} parent=27 // pred_fallthru
          _
        %s174 = sand.u32 %s66, 1
        %s175 = scalar_lea.sflag [#allocation6], %s174
        %s176 = sand.u32 %s66, 1
        %s177 = smul.addr %s176, 128
        %s178 = scalar_lea.vmem [#allocation5], %s177
        // Predicated region
        $region33: #{tpu_custom_call.1} parent=27 // pred_check
          %p179 = pneg %p79
        $region34: #{tpu_custom_call.1} parent=27 // pred_check_branch
          %181 = sbr.rel (%p179) target = $region36
        $region35: #{tpu_custom_call.1} parent=27 // pred_region
          %182 = dma.done %s175, 2048
        $region36: #{tpu_custom_call.1} parent=27 // pred_fallthru
          _
        %p183 = pneg %p53
        %p184 = pneg %p50
        %s185 = sand.u32 %s66, 1
        %s186 = scalar_lea.sflag [#allocation6], %s185
        %s187 = sand.u32 %s66, 1
        %s188 = smul.addr %s187, 128
        %s189 = scalar_lea.vmem [#allocation5], %s188
        %p190 = pneg %p79
        %p191 = pneg %p76
        %p192 = pneg %p107
        %p193 = pneg %p104
        %s194 = sand.u32 %s94, 1
        %s195 = scalar_lea.sflag [#allocation4], %s194
        %s196 = sand.u32 %s94, 1
        %s197 = smul.addr %s196, 128
        %s198 = scalar_lea.vmem [#allocation7], %s197
        %s199 = smul.u32 16, %s25
        %s200 = smul.u32 16, %s25
        %v201 = vld [vmem:[#allocation2] sm:$0xff]
        %v202 = vld [vmem:[#allocation2 + $0x8] sm:$0xff]
        %v203 = vld [vmem:[#allocation2 + $0x10] sm:$0xff]
        %v204 = vld [vmem:[#allocation2 + $0x18] sm:$0xff]
        %v205 = vld [vmem:[#allocation2 + $0x20] sm:$0xff]
        %v206 = vld [vmem:[#allocation2 + $0x28] sm:$0xff]
        %v207 = vld [vmem:[#allocation2 + $0x30] sm:$0xff]
        %v208 = vld [vmem:[#allocation2 + $0x38] sm:$0xff]
        %v209 = vld [vmem:[#allocation2 + $0x40] sm:$0xff]
        %v210 = vld [vmem:[#allocation2 + $0x48] sm:$0xff]
        %v211 = vld [vmem:[#allocation2 + $0x50] sm:$0xff]
        %v212 = vld [vmem:[#allocation2 + $0x58] sm:$0xff]
        %v213 = vld [vmem:[#allocation2 + $0x60] sm:$0xff]
        %v214 = vld [vmem:[#allocation2 + $0x68] sm:$0xff]
        %v215 = vld [vmem:[#allocation2 + $0x70] sm:$0xff]
        %v216 = vld [vmem:[#allocation2 + $0x78] sm:$0xff]
        %v217 = vld [vmem:[%s178] sm:$0xff]
        %v218 = vld [vmem:[%s178 + $0x8] sm:$0xff]
        %v219 = vld [vmem:[%s178 + $0x10] sm:$0xff]
        %v220 = vld [vmem:[%s178 + $0x18] sm:$0xff]
        %v221 = vld [vmem:[%s178 + $0x20] sm:$0xff]
        %v222 = vld [vmem:[%s178 + $0x28] sm:$0xff]
        %v223 = vld [vmem:[%s178 + $0x30] sm:$0xff]
        %v224 = vld [vmem:[%s178 + $0x38] sm:$0xff]
        %v225 = vld [vmem:[%s178 + $0x40] sm:$0xff]
        %v226 = vld [vmem:[%s178 + $0x48] sm:$0xff]
        %v227 = vld [vmem:[%s178 + $0x50] sm:$0xff]
        %v228 = vld [vmem:[%s178 + $0x58] sm:$0xff]
        %v229 = vld [vmem:[%s178 + $0x60] sm:$0xff]
        %v230 = vld [vmem:[%s178 + $0x68] sm:$0xff]
        %v231 = vld [vmem:[%s178 + $0x70] sm:$0xff]
        %v232 = vld [vmem:[%s178 + $0x78] sm:$0xff]
        %233 = vmatprep.subr.mxu0 0.0
        %234 = vmatpush1.msra.mxu0 %v217
        %235 = vmatprep.subr.mxu0 0.0
        %236 = vmatpush1.msra.mxu0 %v218
        %237 = vmatprep.subr.mxu0 0.0
        %238 = vmatpush1.msra.mxu0 %v219
        %239 = vmatprep.subr.mxu0 0.0
        %240 = vmatpush1.msra.mxu0 %v220
        %241 = vmatprep.subr.mxu0 0.0
        %242 = vmatpush1.msra.mxu0 %v221
        %243 = vmatprep.subr.mxu0 0.0
        %244 = vmatpush1.msra.mxu0 %v222
        %245 = vmatprep.subr.mxu0 0.0
        %246 = vmatpush1.msra.mxu0 %v223
        %247 = vmatprep.subr.mxu0 0.0
        %248 = vmatpush1.msra.mxu0 %v224
        %249 = vmatprep.subr.mxu0 0.0
        %250 = vmatpush1.msra.mxu0 %v225
        %251 = vmatprep.subr.mxu0 0.0
        %252 = vmatpush1.msra.mxu0 %v226
        %253 = vmatprep.subr.mxu0 0.0
        %254 = vmatpush1.msra.mxu0 %v227
        %255 = vmatprep.subr.mxu0 0.0
        %256 = vmatpush1.msra.mxu0 %v228
        %257 = vmatprep.subr.mxu0 0.0
        %258 = vmatpush1.msra.mxu0 %v229
        %259 = vmatprep.subr.mxu0 0.0
        %260 = vmatpush1.msra.mxu0 %v230
        %261 = vmatprep.subr.mxu0 0.0
        %262 = vmatpush1.msra.mxu0 %v231
        %263 = vmatprep.subr.mxu0 0.0
        %264 = vmatpush1.msra.mxu0 %v232
        %265 = vmatprep.subr.mxu0 0.0
        %266 = vmatpush1.msra.mxu0 0.0
        %267 = vmatprep.subr.mxu0 0.0
        %268 = vmatpush1.msra.mxu0 0.0
        %269 = vmatprep.subr.mxu0 0.0
        %270 = vmatpush1.msra.mxu0 0.0
        %271 = vmatprep.subr.mxu0 0.0
        %272 = vmatpush1.msra.mxu0 0.0
        %273 = vmatprep.subr.mxu0 0.0
        %274 = vmatpush1.msra.mxu0 0.0
        %275 = vmatprep.subr.mxu0 0.0
        %276 = vmatpush1.msra.mxu0 0.0
        %277 = vmatprep.subr.mxu0 0.0
        %278 = vmatpush1.msra.mxu0 0.0
        %279 = vmatprep.subr.mxu0 0.0
        %280 = vmatpush1.msra.mxu0 0.0
        %281 = vmatprep.subr.mxu0 0.0
        %282 = vmatpush1.msra.mxu0 0.0
        %283 = vmatprep.subr.mxu0 0.0
        %284 = vmatpush1.msra.mxu0 0.0
        %285 = vmatprep.subr.mxu0 0.0
        %286 = vmatpush1.msra.mxu0 0.0
        %287 = vmatprep.subr.mxu0 0.0
        %288 = vmatpush1.msra.mxu0 0.0
        %289 = vmatprep.subr.mxu0 0.0
        %290 = vmatpush1.msra.mxu0 0.0
        %291 = vmatprep.subr.mxu0 0.0
        %292 = vmatpush1.msra.mxu0 0.0
        %293 = vmatprep.subr.mxu0 0.0
        %294 = vmatpush1.msra.mxu0 0.0
        %295 = vmatprep.subr.mxu0 0.0
        %296 = vmatpush1.msra.mxu0 0.0
        %297 = vmatprep.mubr.f32.mxu0 0.0
        %298 = vmatmul.mubr.f32.gmra.mrb[0].mxu0 %v201
        %v299 = vpop.f32.mrb[0].mxu0
        %v300 = vadd.f32 0.0, %v299
        %v301 = vpop.f32.mrb[0].mxu0
        %302 = vmatprep.mubr.f32.mxu0 0.0
        %303 = vmatmul.mubr.f32.gmra.mrb[0].mxu0 %v202
        %v304 = vpop.f32.mrb[0].mxu0
        %v305 = vadd.f32 0.0, %v304
        %v306 = vpop.f32.mrb[0].mxu0
        %307 = vmatprep.mubr.f32.mxu0 0.0
        %308 = vmatmul.mubr.f32.gmra.mrb[0].mxu0 %v203
        %v309 = vpop.f32.mrb[0].mxu0
        %v310 = vadd.f32 0.0, %v309
        %v311 = vpop.f32.mrb[0].mxu0
        %312 = vmatprep.mubr.f32.mxu0 0.0
        %313 = vmatmul.mubr.f32.gmra.mrb[0].mxu0 %v204
        %v314 = vpop.f32.mrb[0].mxu0
        %v315 = vadd.f32 0.0, %v314
        %v316 = vpop.f32.mrb[0].mxu0
        %317 = vmatprep.mubr.f32.mxu0 0.0
        %318 = vmatmul.mubr.f32.gmra.mrb[0].mxu0 %v205
        %v319 = vpop.f32.mrb[0].mxu0
        %v320 = vadd.f32 0.0, %v319
        %v321 = vpop.f32.mrb[0].mxu0
        %322 = vmatprep.mubr.f32.mxu0 0.0
        %323 = vmatmul.mubr.f32.gmra.mrb[0].mxu0 %v206
        %v324 = vpop.f32.mrb[0].mxu0
        %v325 = vadd.f32 0.0, %v324
        %v326 = vpop.f32.mrb[0].mxu0
        %327 = vmatprep.mubr.f32.mxu0 0.0
        %328 = vmatmul.mubr.f32.gmra.mrb[0].mxu0 %v207
        %v329 = vpop.f32.mrb[0].mxu0
        %v330 = vadd.f32 0.0, %v329
        %v331 = vpop.f32.mrb[0].mxu0
        %332 = vmatprep.mubr.f32.mxu0 0.0
        %333 = vmatmul.mubr.f32.gmra.mrb[0].mxu0 %v208
        %v334 = vpop.f32.mrb[0].mxu0
        %v335 = vadd.f32 0.0, %v334
        %v336 = vpop.f32.mrb[0].mxu0
        %337 = vmatprep.mubr.f32.mxu0 0.0
        %338 = vmatmul.mubr.f32.gmra.mrb[0].mxu0 %v209
        %v339 = vpop.f32.mrb[0].mxu0
        %v340 = vadd.f32 0.0, %v339
        %v341 = vpop.f32.mrb[0].mxu0
        %342 = vmatprep.mubr.f32.mxu0 0.0
        %343 = vmatmul.mubr.f32.gmra.mrb[0].mxu0 %v210
        %v344 = vpop.f32.mrb[0].mxu0
        %v345 = vadd.f32 0.0, %v344
        %v346 = vpop.f32.mrb[0].mxu0
        %347 = vmatprep.mubr.f32.mxu0 0.0
        %348 = vmatmul.mubr.f32.gmra.mrb[0].mxu0 %v211
        %v349 = vpop.f32.mrb[0].mxu0
        %v350 = vadd.f32 0.0, %v349
        %v351 = vpop.f32.mrb[0].mxu0
        %352 = vmatprep.mubr.f32.mxu0 0.0
        %353 = vmatmul.mubr.f32.gmra.mrb[0].mxu0 %v212
        %v354 = vpop.f32.mrb[0].mxu0
        %v355 = vadd.f32 0.0, %v354
        %v356 = vpop.f32.mrb[0].mxu0
        %357 = vmatprep.mubr.f32.mxu0 0.0
        %358 = vmatmul.mubr.f32.gmra.mrb[0].mxu0 %v213
        %v359 = vpop.f32.mrb[0].mxu0
        %v360 = vadd.f32 0.0, %v359
        %v361 = vpop.f32.mrb[0].mxu0
        %362 = vmatprep.mubr.f32.mxu0 0.0
        %363 = vmatmul.mubr.f32.gmra.mrb[0].mxu0 %v214
        %v364 = vpop.f32.mrb[0].mxu0
        %v365 = vadd.f32 0.0, %v364
        %v366 = vpop.f32.mrb[0].mxu0
        %367 = vmatprep.mubr.f32.mxu0 0.0
        %368 = vmatmul.mubr.f32.gmra.mrb[0].mxu0 %v215
        %v369 = vpop.f32.mrb[0].mxu0
        %v370 = vadd.f32 0.0, %v369
        %v371 = vpop.f32.mrb[0].mxu0
        %372 = vmatprep.mubr.f32.mxu0 0.0
        %373 = vmatmul.mubr.f32.gmra.mrb[0].mxu0 %v216
        %v374 = vpop.f32.mrb[0].mxu0
        %v375 = vadd.f32 0.0, %v374
        %v376 = vpop.f32.mrb[0].mxu0
        %377 = vdwg.mxu0
        %378 = vst [vmem:[%s198] sm:$0xff] %v300
        %379 = vst [vmem:[%s198 + $0x8] sm:$0xff] %v305
        %380 = vst [vmem:[%s198 + $0x10] sm:$0xff] %v310
        %381 = vst [vmem:[%s198 + $0x18] sm:$0xff] %v315
        %382 = vst [vmem:[%s198 + $0x20] sm:$0xff] %v320
        %383 = vst [vmem:[%s198 + $0x28] sm:$0xff] %v325
        %384 = vst [vmem:[%s198 + $0x30] sm:$0xff] %v330
        %385 = vst [vmem:[%s198 + $0x38] sm:$0xff] %v335
        %386 = vst [vmem:[%s198 + $0x40] sm:$0xff] %v340
        %387 = vst [vmem:[%s198 + $0x48] sm:$0xff] %v345
        %388 = vst [vmem:[%s198 + $0x50] sm:$0xff] %v350
        %389 = vst [vmem:[%s198 + $0x58] sm:$0xff] %v355
        %390 = vst [vmem:[%s198 + $0x60] sm:$0xff] %v360
        %391 = vst [vmem:[%s198 + $0x68] sm:$0xff] %v365
        %392 = vst [vmem:[%s198 + $0x70] sm:$0xff] %v370
        %393 = vst [vmem:[%s198 + $0x78] sm:$0xff] %v375
        %s394 = sand.u32 %s94, 1
        %s395 = scalar_lea.sflag [#allocation4], %s394
        %s396 = sand.u32 %s94, 1
        %s397 = smul.addr %s396, 128
        %s398 = scalar_lea.vmem [#allocation7], %s397
        // Predicated region
        $region37: #{tpu_custom_call.1} parent=27 // pred_check
          %p399 = pneg %p104
        $region38: #{tpu_custom_call.1} parent=27 // pred_check_branch
          %401 = sbr.rel (%p399) target = $region40
        $region39: #{tpu_custom_call.1} parent=27 // pred_region
          %s402 = smul.u32 16, %s25
          %s404 = ssub.s32 2048, 2048
          %405 = vsyncadd %s395, %s404
          %s406 = smul.addr %s24, 16
          %s407 = sadd.s32 %s402, %s406
          %s408 = smul.addr %s407, 128
          %s409 = scalar_lea.hbm %s2, %s408
          %s410 = sshll.u32 %s398, 4
          %s411 = int_to_ptr.vmem [resolvable:$true] %s410
          %416 = dma.vmem_to_hbm [thread:$0]  %s411, 2048, %s409, %s395, 128, 128, 8
        $region40: #{tpu_custom_call.1} parent=27 // pred_fallthru
          _
      $region28: #{tpu_custom_call.1} parent=5 // pred_fallthru
        _
      %p417 = scmp.le.s32.totalorder 2, %s15
      // Predicated region
      $region41: #{tpu_custom_call.1} parent=5 // pred_check
        %p418 = pneg %p417
      $region42: #{tpu_custom_call.1} parent=5 // pred_check_branch
        %420 = sbr.rel (%p418) target = $region44
      $region43: #{tpu_custom_call.1} parent=5 // pred_region
        %s421 = ssub.s32 %s15, 2
        // Predicated region
        $region45: #{tpu_custom_call.1} parent=43 // pred_check
          %p422 = pneg %p110
        $region46: #{tpu_custom_call.1} parent=43 // pred_check_branch
          %424 = sbr.rel (%p422) target = $region48
        $region47: #{tpu_custom_call.1} parent=43 // pred_region
          %s425 = sand.u32 %s95, 1
          %s426 = scalar_lea.sflag [#allocation4], %s425
          %s427 = sand.u32 %s95, 1
          %s428 = smul.addr %s427, 128
          %s429 = scalar_lea.vmem [#allocation7], %s428
          %430 = dma.done %s426, 2048
        $region48: #{tpu_custom_call.1} parent=43 // pred_fallthru
          _
      $region44: #{tpu_custom_call.1} parent=5 // pred_fallthru
        _
    $region6: #{tpu_custom_call.1} parent=1 // loop_footer
      %s19 = sadd.s32 1, %s15
    $region7: #{tpu_custom_call.1} parent=1 // loop_footer_branch
      %14 = sbr.rel target = $region3
    $region8: #{tpu_custom_call.1} parent=1 // loop_exit
      _
    %431 = vsyncpa [#allocation3], 1
    %s432 = scalar_lea.sflag [#allocation3], 1
    %433 = vsyncpa %s432, 1
    %434 = vsyncpa [#allocation6], 1
    %s435 = scalar_lea.sflag [#allocation6], 1
    %436 = vsyncpa %s435, 1
    %437 = vsyncpa [#allocation4], 1
    %s438 = scalar_lea.sflag [#allocation4], 1
    %439 = vsyncpa %s438, 1

</llo_original>
